<compile_context>
chip_gen: v7x
topology: tpu7x:2x2x1
jax: 0.10.0
libtpu: 0.0.40
codegen_flags: <defaults>
</compile_context>

<pallas_src>
import functools

import jax
import jax.numpy as jnp
from jax.experimental import pallas as pl
from jax.experimental.pallas import tpu as pltpu


def _round_up(a, b):
    return (a + b - 1) // b * b


def _device_defaults():
    """(tile_nt, vmem_limit_bytes) tuned per TPU generation.

    v7x has only 64 MiB VMEM per TensorCore -> cap the NT tile at 1024 and
    the scoped limit at 40 MiB.  v5e / v6e have 128 MiB physical VMEM ->
    larger tiles amortize the ~0.35us per-grid-step overhead and give the MXU
    longer uninterrupted push sequences.
    """
    try:
        cap = int(pltpu.get_tpu_info().vmem_capacity_bytes)
    except Exception:
        try:
            kind = jax.devices()[0].device_kind.lower()
            cap = 64 * 1024 * 1024 if "v7" in kind else 128 * 1024 * 1024
        except Exception:
            cap = 128 * 1024 * 1024
    if cap <= 64 * 1024 * 1024:
        return 1024, 40 * 1024 * 1024
    return 2048, 64 * 1024 * 1024


def _vq_kernel(xa_ref, cbaug_ref, cb_ref, q_ref, loss_ref, counts_ref,
               *, dim, mm_dtype):
    """One NT tile of the VQ forward.

    xa_ref:     (TNT, D+1) f32  x tile with a trailing ones column
    cbaug_ref:  (D+1, M)        [-2 * cb_norm^T ; e_sq]  (resident, mm dtype)
    cb_ref:     (M, D)    f32   raw codebook for the gather (resident)
    q_ref:      (TNT, D)  f32   quantized output tile
    loss_ref:   (1, 1, 1) f32   partial sum of (x - q)^2 for this tile
    counts_ref: (1, 1, M) f32   partial per-codeword assignment counts
    """
    xa = xa_ref[...]                      # (TNT, D+1) f32
    x = xa[:, :dim]                       # (TNT, D) original rows (f32)
    tnt = xa.shape[0]
    m = cb_ref.shape[0]

    # Distance straight out of the MXU: the -2 scale and the ||cb_norm||^2
    # bias live in cb_aug, the ones column in xa picks up the bias row.
    #   dist[i, j] = e_sq[j] - 2 * <x[i], cb_norm[j]>
    # (the per-row ||x||^2 term is dropped: it does not change the argmin).
    dist = jnp.dot(xa.astype(mm_dtype), cbaug_ref[...],
                   preferred_element_type=jnp.float32)            # (TNT, M)

    # argmin along the codebook axis with first-index tie-break
    # (== torch.argmin).  Built from two monoid reductions because Mosaic
    # does not lower the variadic reduce behind jnp.argmin.
    col = jax.lax.broadcasted_iota(jnp.int32, (tnt, m), 1)
    min_dist = jnp.min(dist, axis=-1, keepdims=True)              # (TNT, 1)
    indices = jnp.min(jnp.where(dist == min_dist, col, m),
                      axis=-1, keepdims=True)                     # (TNT, 1)

    # One-hot encodings; gather from the *raw* f32 codebook via MXU matmul
    # (kept f32 so emitted quantized values match the reference).
    enc = (col == indices).astype(jnp.float32)                    # (TNT, M)
    quantized = jnp.dot(enc, cb_ref[...], preferred_element_type=jnp.float32)
    # TODO(synk): for D < 128 this store is lane-masked; a lane-dense
    # (TNT*D/128, 128) packed output needs an in-kernel reshape across the
    # last two dims, which is left out for lowering safety.
    q_ref[...] = quantized

    diff = x - quantized
    sq_rows = jnp.sum(diff * diff, axis=1, keepdims=True)         # (TNT, 1)
    loss_ref[...] = jnp.sum(sq_rows, axis=0, keepdims=True).reshape(1, 1, 1)
    counts_ref[...] = jnp.sum(enc, axis=0, keepdims=True).reshape(1, 1, m)


def vq_embedding_ema_forward(x, codebook, *, tile_nt=None, dist_in_bf16=True,
                             vmem_limit_bytes=None):
    """x: (N, T, D) (or (N, D, T), permuted like the module), codebook: (M, D).

    Returns (quantized_, commitment_loss, perplexity) matching the forward
    values of VQEmbeddingEMA.forward.
    """
    if x.shape[-1] != codebook.shape[-1]:
        x = jnp.transpose(x, (0, 2, 1))            # mirrors x.permute(0, 2, 1)
    n, t, d = x.shape
    m, d2 = codebook.shape
    assert d == d2, "x last dim must match codebook dim"

    nt = n * t
    auto_tnt, auto_vmem = _device_defaults()
    if tile_nt is None:
        tile_nt = auto_tnt
    if vmem_limit_bytes is None:
        vmem_limit_bytes = auto_vmem
    mm_dtype = jnp.bfloat16 if dist_in_bf16 else jnp.float32

    # TODO(synk): if the caller's x is bf16 it could be streamed as bf16 to
    # halve the x DMA; kept f32 here because the loss needs the f32 input.
    x_flat = x.reshape(nt, d).astype(jnp.float32)
    cb = codebook.astype(jnp.float32)

    # ---- hoisted codebook preprocessing (once, outside the grid) ----------
    cb_norm = cb / (jnp.sqrt(jnp.sum(cb * cb, axis=1, keepdims=True)) + 1e-4)
    e_sq = jnp.sum(cb_norm * cb_norm, axis=1).reshape(1, m)        # (1, M)
    # Fold the -2 scale and e_sq bias into the matmul weights.
    cb_aug = jnp.concatenate([-2.0 * cb_norm.T, e_sq], axis=0)     # (D+1, M)
    cb_aug = cb_aug.astype(mm_dtype)

    # ---- x augmented with a ones column, tiled / padded over NT -----------
    x_aug = jnp.concatenate([x_flat, jnp.ones((nt, 1), jnp.float32)], axis=1)

    tnt = max(8, min(int(tile_nt), _round_up(nt, 8)))
    nt_pad = _round_up(nt, tnt)
    num_tiles = nt_pad // tnt
    pad_rows = nt_pad - nt
    if pad_rows:
        # Padded rows are all-zero (including the ones column) -> their
        # distance row is exactly 0 -> first-index argmin = 0 -> q = cb[0].
        # Corrected analytically below instead of masking inside the kernel.
        x_aug = jnp.pad(x_aug, ((0, pad_rows), (0, 0)))

    kernel = functools.partial(_vq_kernel, dim=d, mm_dtype=mm_dtype)

    flops = 2 * nt_pad * m * (d + 1) + 2 * nt_pad * m * d
    mm_bytes = 2 if dist_in_bf16 else 4
    bytes_accessed = (4 * nt_pad * (d + 1) + mm_bytes * (d + 1) * m
                      + 4 * m * d + 4 * nt_pad * d + 4 * num_tiles * (m + 1))

    # TODO(synk): the two resident codebook inputs could use
    # pipeline_mode=pl.Buffered(1) (constant index_map) to drop their second
    # pipeline buffer on v7x; omitted to keep lowering maximally portable.
    q_pad, loss_part, counts_part = pl.pallas_call(
        kernel,
        out_shape=(
            jax.ShapeDtypeStruct((nt_pad, d), jnp.float32),
            jax.ShapeDtypeStruct((num_tiles, 1, 1), jnp.float32),
            jax.ShapeDtypeStruct((num_tiles, 1, m), jnp.float32),
        ),
        grid=(num_tiles,),
        in_specs=[
            pl.BlockSpec((tnt, d + 1), lambda i: (i, 0)),   # x tile (pipelined)
            pl.BlockSpec((d + 1, m), lambda i: (0, 0)),     # folded codebook (resident)
            pl.BlockSpec((m, d), lambda i: (0, 0)),         # raw codebook (resident)
        ],
        out_specs=(
            pl.BlockSpec((tnt, d), lambda i: (i, 0)),
            pl.BlockSpec((1, 1, 1), lambda i: (i, 0, 0)),
            pl.BlockSpec((1, 1, m), lambda i: (i, 0, 0)),
        ),
        compiler_params=pltpu.CompilerParams(
            dimension_semantics=("parallel",),
            vmem_limit_bytes=int(vmem_limit_bytes),
        ),
        cost_estimate=pl.CostEstimate(
            flops=flops, transcendentals=0, bytes_accessed=bytes_accessed),
    )(x_aug, cb_aug, cb)

    quantized = q_pad[:nt].reshape(n, t, d)
    # quantized_ = (x + (q - x).detach() + q) / 2  -> forward value is just q.
    quantized_ = quantized
    # TODO(synk): straight-through gradient and the EMA codebook update are
    # training-time behaviour, not part of the forward value; not implemented.

    loss_sum = jnp.sum(loss_part)
    counts = jnp.sum(counts_part, axis=(0, 1))                     # (M,)
    if pad_rows:
        loss_sum = loss_sum - jnp.float32(pad_rows) * jnp.sum(cb[0] * cb[0])
        counts = counts.at[0].add(-jnp.float32(pad_rows))

    commitment_loss = loss_sum / jnp.float32(nt * d)               # mse_loss
    avg_probs = counts / jnp.float32(nt)
    perplexity = jnp.exp(-jnp.sum(avg_probs * jnp.log(avg_probs + 1e-10)))
    return quantized_, commitment_loss, perplexity


if __name__ == "__main__":
    # Small deterministic example consistent with the module:
    #   x: (N, T, z_dim) = (2, 8, 32); codebook: (n_embeddings, z_dim) = (256, 32)
    key = jax.random.PRNGKey(0)
    kx, kc = jax.random.split(key)
    N, T, D, M = 2, 8, 32, 256
    x = jax.random.normal(kx, (N, T, D), dtype=jnp.float32)
    # Deterministic synthetic codebook (stands in for codebook_custom /
    # codebook_1024.npy; no file reads in this script).
    codebook = jax.random.normal(kc, (M, D), dtype=jnp.float32)

    fwd = jax.jit(vq_embedding_ema_forward)
    quantized_, loss, perplexity = fwd(x, codebook)
    jax.block_until_ready((quantized_, loss, perplexity))

    assert quantized_.shape == (N, T, D)
    assert loss.shape == () and perplexity.shape == ()
    assert bool(jnp.isfinite(loss)) and bool(jnp.isfinite(perplexity))
    print("KERNEL_OK")
</pallas_src>

<mosaic_0001>
module attributes {stable_mosaic.version = 11 : i64} {
  func.func @_vq_kernel(%arg0: i32, %arg1: memref<16x33xf32, #tpu.memory_space<vmem>>, %arg2: memref<33x256xbf16, #tpu.memory_space<vmem>>, %arg3: memref<256x32xf32, #tpu.memory_space<vmem>>, %arg4: memref<16x32xf32, #tpu.memory_space<vmem>>, %arg5: memref<1x1x1xf32, #tpu.memory_space<vmem>>, %arg6: memref<1x1x256xf32, #tpu.memory_space<vmem>>) attributes {dimension_semantics = [#tpu.dimension_semantics<parallel>], iteration_bounds = array<i64: 1>, scalar_prefetch = 0 : i64, scratch_operands = 0 : i64, tpu.core_type = #tpu.core_type<tc>, window_params = [{transform_indices = @transform_0, window_bounds = array<i64: 16, 33>}, {pipeline_mode = #tpu.pipeline_mode<synchronous>, transform_indices = @transform_1, window_bounds = array<i64: 33, 256>}, {pipeline_mode = #tpu.pipeline_mode<synchronous>, transform_indices = @transform_2, window_bounds = array<i64: 256, 32>}, {transform_indices = @transform_3, window_bounds = array<i64: 16, 32>}, {transform_indices = @transform_4, window_bounds = array<i64: 1, 1, 1>}, {transform_indices = @transform_5, window_bounds = array<i64: 1, 1, 256>}]} {
    %c0 = arith.constant 0 : index
    %c0_0 = arith.constant 0 : index
    %0 = vector.load %arg1[%c0, %c0_0] : memref<16x33xf32, #tpu.memory_space<vmem>>, vector<16x33xf32>
    %1 = vector.extract_strided_slice %0 {offsets = [0, 0], sizes = [16, 32], strides = [1, 1]} : vector<16x33xf32> to vector<16x32xf32>
    %2 = arith.truncf %0 : vector<16x33xf32> to vector<16x33xbf16>
    %c0_1 = arith.constant 0 : index
    %c0_2 = arith.constant 0 : index
    %3 = vector.load %arg2[%c0_1, %c0_2] : memref<33x256xbf16, #tpu.memory_space<vmem>>, vector<33x256xbf16>
    %cst = arith.constant dense<0.000000e+00> : vector<16x256xf32>
    %4 = tpu.matmul %2, %3, %cst {dimension_numbers = #tpu.dot_dimension_numbers<[1], [0], [0], [1], [0, 0, 1, 1], [], []>} : vector<16x33xbf16>, vector<33x256xbf16>, vector<16x256xf32> -> vector<16x256xf32>
    %5 = tpu.iota {dimensions = array<i32: 1>} : vector<16x256xi32>
    %cst_3 = arith.constant dense<0x7F800000> : vector<16xf32>
    %6 = vector.multi_reduction <minimumf>, %4, %cst_3 [1] : vector<16x256xf32> to vector<16xf32>
    %7 = vector.shape_cast %6 : vector<16xf32> to vector<16x1xf32>
    %8 = vector.broadcast %7 : vector<16x1xf32> to vector<16x256xf32>
    %9 = arith.cmpf oeq, %4, %8 : vector<16x256xf32>
    %c256_i32 = arith.constant 256 : i32
    %10 = vector.broadcast %c256_i32 : i32 to vector<16x256xi32>
    %11 = arith.select %9, %5, %10 : vector<16x256xi1>, vector<16x256xi32>
    %cst_4 = arith.constant dense<2147483647> : vector<16xi32>
    %12 = vector.multi_reduction <minsi>, %11, %cst_4 [1] : vector<16x256xi32> to vector<16xi32>
    %13 = vector.shape_cast %12 : vector<16xi32> to vector<16x1xi32>
    %14 = vector.broadcast %13 : vector<16x1xi32> to vector<16x256xi32>
    %15 = arith.cmpi eq, %5, %14 : vector<16x256xi32>
    %16 = arith.extui %15 : vector<16x256xi1> to vector<16x256xi32>
    %17 = arith.sitofp %16 : vector<16x256xi32> to vector<16x256xf32>
    %c0_5 = arith.constant 0 : index
    %c0_6 = arith.constant 0 : index
    %18 = vector.load %arg3[%c0_5, %c0_6] : memref<256x32xf32, #tpu.memory_space<vmem>>, vector<256x32xf32>
    %cst_7 = arith.constant dense<0.000000e+00> : vector<16x32xf32>
    %19 = tpu.matmul %17, %18, %cst_7 {dimension_numbers = #tpu.dot_dimension_numbers<[1], [0], [0], [1], [0, 0, 1, 1], [], []>} : vector<16x256xf32>, vector<256x32xf32>, vector<16x32xf32> -> vector<16x32xf32>
    %c0_8 = arith.constant 0 : index
    %c0_9 = arith.constant 0 : index
    %20 = vector.load %arg4[%c0_8, %c0_9] : memref<16x32xf32, #tpu.memory_space<vmem>>, vector<16x32xf32>
    tpu.vector_store %arg4[%c0_8, %c0_9], %19 {strides = array<i32>} : memref<16x32xf32, #tpu.memory_space<vmem>>, vector<16x32xf32>,
    %21 = arith.subf %1, %19 : vector<16x32xf32>
    %22 = arith.mulf %21, %21 : vector<16x32xf32>
    %cst_10 = arith.constant dense<0.000000e+00> : vector<16xf32>
    %23 = vector.multi_reduction <add>, %22, %cst_10 [1] : vector<16x32xf32> to vector<16xf32>
    %24 = vector.shape_cast %23 : vector<16xf32> to vector<16x1xf32>
    %cst_11 = arith.constant dense<0.000000e+00> : vector<1xf32>
    %25 = vector.multi_reduction <add>, %24, %cst_11 [0] : vector<16x1xf32> to vector<1xf32>
    %26 = vector.shape_cast %25 : vector<1xf32> to vector<1x1xf32>
    %27 = vector.shape_cast %26 : vector<1x1xf32> to vector<1x1x1xf32>
    %c0_12 = arith.constant 0 : index
    %c0_13 = arith.constant 0 : index
    %c0_14 = arith.constant 0 : index
    %28 = vector.load %arg5[%c0_12, %c0_13, %c0_14] : memref<1x1x1xf32, #tpu.memory_space<vmem>>, vector<1x1x1xf32>
    tpu.vector_store %arg5[%c0_12, %c0_13, %c0_14], %27 {strides = array<i32>} : memref<1x1x1xf32, #tpu.memory_space<vmem>>, vector<1x1x1xf32>,
    %cst_15 = arith.constant dense<0.000000e+00> : vector<256xf32>
    %29 = vector.multi_reduction <add>, %17, %cst_15 [0] : vector<16x256xf32> to vector<256xf32>
    %30 = vector.shape_cast %29 : vector<256xf32> to vector<1x256xf32>
    %31 = vector.shape_cast %30 : vector<1x256xf32> to vector<1x1x256xf32>
    %c0_16 = arith.constant 0 : index
    %c0_17 = arith.constant 0 : index
    %c0_18 = arith.constant 0 : index
    %32 = vector.load %arg6[%c0_16, %c0_17, %c0_18] : memref<1x1x256xf32, #tpu.memory_space<vmem>>, vector<1x1x256xf32>
    tpu.vector_store %arg6[%c0_16, %c0_17, %c0_18], %31 {strides = array<i32>} : memref<1x1x256xf32, #tpu.memory_space<vmem>>, vector<1x1x256xf32>,
    return
  }
  func.func @transform_0(%arg0: i32) -> (i32, i32) {
    %c0_i32 = arith.constant 0 : i32
    %c0_i32_0 = arith.constant 0 : i32
    return %arg0, %c0_i32 : i32, i32
  }
  func.func @transform_1(%arg0: i32) -> (i32, i32) {
    %c0_i32 = arith.constant 0 : i32
    %c0_i32_0 = arith.constant 0 : i32
    %c0_i32_1 = arith.constant 0 : i32
    return %c0_i32, %c0_i32_0 : i32, i32
  }
  func.func @transform_2(%arg0: i32) -> (i32, i32) {
    %c0_i32 = arith.constant 0 : i32
    %c0_i32_0 = arith.constant 0 : i32
    %c0_i32_1 = arith.constant 0 : i32
    return %c0_i32, %c0_i32_0 : i32, i32
  }
  func.func @transform_3(%arg0: i32) -> (i32, i32) {
    %c0_i32 = arith.constant 0 : i32
    %c0_i32_0 = arith.constant 0 : i32
    return %arg0, %c0_i32 : i32, i32
  }
  func.func @transform_4(%arg0: i32) -> (i32, i32, i32) {
    %c0_i32 = arith.constant 0 : i32
    %c0_i32_0 = arith.constant 0 : i32
    %c0_i32_1 = arith.constant 0 : i32
    return %arg0, %c0_i32, %c0_i32_0 : i32, i32, i32
  }
  func.func @transform_5(%arg0: i32) -> (i32, i32, i32) {
    %c0_i32 = arith.constant 0 : i32
    %c0_i32_0 = arith.constant 0 : i32
    %c0_i32_1 = arith.constant 0 : i32
    return %arg0, %c0_i32, %c0_i32_0 : i32, i32, i32
  }
}

</mosaic_0001>

<llo_original>
// kernel: vq_embedding_ema_forward.1
$region0: #{vq_embedding_ema_forward.1}
  #allocation0 [shape = 'u32[]', space=smem, size = 0x4, offset = 0x4, fixed_abs, tag = 'smem constant byte address 0x4 - core index']
  #allocation1 [shape = 'u32[144,128]{1,0:T(1,128)}', space=vmem, size = 0x12000, scoped, tag = 'internal scratch']
  %s0 = inlined_call_operand.hbm [shape: f32[16,33], index: 0, kind: input, shape index: {}]
  %s1 = inlined_call_operand.hbm [shape: bf16[33,256], index: 1, kind: input, shape index: {}]
  %s2 = inlined_call_operand.hbm [shape: f32[256,32], index: 2, kind: input, shape index: {}]
  %s3 = inlined_call_operand.hbm [shape: f32[16,32], index: 3, kind: output, shape index: {0}]
  %s4 = inlined_call_operand.hbm [shape: f32[1,1,1], index: 4, kind: output, shape index: {1}]
  %s5 = inlined_call_operand.hbm [shape: f32[1,1,256], index: 5, kind: output, shape index: {2}]
  %6 = xla_tuple %s3, %s4, %s5
  %s7 = sld [smem:[#allocation0]]
  $region50: #{vq_embedding_ema_forward.1} parent=0
    _
  %s9 = ssub.s32 1, %s7
  %s10 = scalar_select 0, %s9, %s7
  $region1: #{vq_embedding_ema_forward.1} parent=0
    #allocation2 [shape = 'u8[8192]{0}', space=vmem, size = 0x2000, scoped, tag = 'input window, operand 0, single buffered']
    #allocation3 [shape = 's32[1]{0}', space=sflag, size = 0x4, scoped, tag = 'scoped memory for vq_embedding_ema_forward.1']
    #allocation4 [shape = 's32[1]{0}', space=sflag, size = 0x4, scoped, tag = 'scoped memory for vq_embedding_ema_forward.1']
    #allocation5 [shape = 'u8[20480]{0}', space=vmem, size = 0x5000, scoped, tag = 'input window, operand 1, single buffered']
    #allocation6 [shape = 's32[1]{0}', space=sflag, size = 0x4, scoped, tag = 'scoped memory for vq_embedding_ema_forward.1']
    #allocation7 [shape = 'u8[131072]{0}', space=vmem, size = 0x20000, scoped, tag = 'input window, operand 2, single buffered']
    #allocation8 [shape = 'u8[8192]{0}', space=vmem, size = 0x2000, scoped, tag = 'output window, operand 0, single buffered']
    #allocation9 [shape = 'u8[512]{0}', space=vmem, size = 0x400, scoped, tag = 'output window, operand 1, single buffered']
    #allocation10 [shape = 's32[1]{0}', space=sflag, size = 0x4, scoped, tag = 'scoped memory for vq_embedding_ema_forward.1']
    #allocation11 [shape = 'u8[1024]{0}', space=vmem, size = 0x400, scoped, tag = 'output window, operand 2, single buffered']
    %11 = vsyncpa [#allocation3], 0
    %12 = vsyncpa [#allocation6], 0
    %13 = vsyncpa [#allocation4], 0
    %14 = vsyncpa [#allocation10], 0
    // Predicated region
    $region2: #{vq_embedding_ema_forward.1} parent=1 // pred_check
      _
    $region3: #{vq_embedding_ema_forward.1} parent=1 // pred_check_branch
      %16 = sbr.rel (0) target = $region5
    $region4: #{vq_embedding_ema_forward.1} parent=1 // pred_region
      %s18 = ssub.s32 256, 256
      %19 = vsyncadd [#allocation3], %s18
      %s20 = sshll.u32 [#allocation2], 4
      %s21 = int_to_ptr.vmem [resolvable:$true] %s20
      %26 = dma.hbm_to_vmem [thread:$0]  %s0, 256, %s21, [#allocation3], 128, 128, 8
    $region5: #{vq_embedding_ema_forward.1} parent=1 // pred_fallthru
      _
    // Predicated region
    $region6: #{vq_embedding_ema_forward.1} parent=1 // pred_check
      _
    $region7: #{vq_embedding_ema_forward.1} parent=1 // pred_check_branch
      %28 = sbr.rel (0) target = $region9
    $region8: #{vq_embedding_ema_forward.1} parent=1 // pred_region
      %s30 = ssub.s32 640, 640
      %31 = vsyncadd [#allocation6], %s30
      %s32 = sshll.u32 [#allocation5], 4
      %s33 = int_to_ptr.vmem [resolvable:$true] %s32
      %38 = dma.hbm_to_vmem [thread:$0]  %s1, 640, %s33, [#allocation6], 128, 128, 8
    $region9: #{vq_embedding_ema_forward.1} parent=1 // pred_fallthru
      _
    // Predicated region
    $region10: #{vq_embedding_ema_forward.1} parent=1 // pred_check
      _
    $region11: #{vq_embedding_ema_forward.1} parent=1 // pred_check_branch
      %40 = sbr.rel (0) target = $region13
    $region12: #{vq_embedding_ema_forward.1} parent=1 // pred_region
      %s42 = ssub.s32 4096, 4096
      %43 = vsyncadd [#allocation6], %s42
      %s44 = sshll.u32 [#allocation7], 4
      %s45 = int_to_ptr.vmem [resolvable:$true] %s44
      %50 = dma.hbm_to_vmem [thread:$0]  %s2, 4096, %s45, [#allocation6], 128, 128, 8
    $region13: #{vq_embedding_ema_forward.1} parent=1 // pred_fallthru
      _
    // Predicated region
    $region14: #{vq_embedding_ema_forward.1} parent=1 // pred_check
      _
    $region15: #{vq_embedding_ema_forward.1} parent=1 // pred_check_branch
      %52 = sbr.rel (0) target = $region17
    $region16: #{vq_embedding_ema_forward.1} parent=1 // pred_region
      %53 = dma.done [#allocation3], 256
    $region17: #{vq_embedding_ema_forward.1} parent=1 // pred_fallthru
      _
    // Predicated region
    $region18: #{vq_embedding_ema_forward.1} parent=1 // pred_check
      _
    $region19: #{vq_embedding_ema_forward.1} parent=1 // pred_check_branch
      %55 = sbr.rel (0) target = $region21
    $region20: #{vq_embedding_ema_forward.1} parent=1 // pred_region
      %56 = dma.done [#allocation6], 640
    $region21: #{vq_embedding_ema_forward.1} parent=1 // pred_fallthru
      _
    // Predicated region
    $region22: #{vq_embedding_ema_forward.1} parent=1 // pred_check
      _
    $region23: #{vq_embedding_ema_forward.1} parent=1 // pred_check_branch
      %58 = sbr.rel (0) target = $region25
    $region24: #{vq_embedding_ema_forward.1} parent=1 // pred_region
      %59 = dma.done [#allocation6], 4096
    $region25: #{vq_embedding_ema_forward.1} parent=1 // pred_fallthru
      _
    %v61 = vld [vmem:[#allocation2] sm:$0xff]
    %v62 = vld [vmem:[#allocation2 + $0x8] sm:$0xff]
    %v63 = vpack.c.bf16 %v62, %v61
    %v64 = vld [vmem:[#allocation5] sm:$0xff]
    %v65 = vld [vmem:[#allocation5 + $0x8] sm:$0xff]
    %v66 = vld [vmem:[#allocation5 + $0x10] sm:$0xff]
    %v67 = vld [vmem:[#allocation5 + $0x18] sm:$0xff]
    %v68 = vld [vmem:[#allocation5 + $0x20] sm:$0x11]
    %v74 = vunpack.c.l.b16 %v64
    %v75 = vunpack.c.h.b16 %v64
    %v76 = vunpack.c.l.b16 %v65
    %v77 = vunpack.c.h.b16 %v65
    %v78 = vunpack.c.l.b16 %v66
    %v79 = vunpack.c.h.b16 %v66
    %v80 = vunpack.c.l.b16 %v67
    %v81 = vunpack.c.h.b16 %v67
    %v82 = vunpack.c.l.b16 %v68
    %v83 = vunpack.c.h.b16 %v68
    %v84 = vpack.c.b16 %v76, %v74
    %v85 = vpack.c.b16 %v77, %v75
    %v86 = vpack.c.b16 %v80, %v78
    %v87 = vpack.c.b16 %v81, %v79
    %v88 = vpack.c.b16 %v82, %v82
    %v89 = vpack.c.b16 %v83, %v83
    %vm94 = vcmask 269312
    %v96 = vsel %vm94, %v63, 0
    %vm98 = vcmask 1040384
    %v99 = vsel 0, 4294967295, 65535
    %v100 = vsel %vm98, %v99, 0
    %v102 = vand.u32 %v88, %v100
    %v105 = vand.u32 %v89, %v100
    %107 = vmatprep.subr.bf16.mxu0 %v85
    %108 = vmatpush1.bf16.msra.mxu0 %v84
    %109 = vmatprep.subr.bf16.mxu0 %v87
    %110 = vmatpush1.bf16.msra.mxu0 %v86
    %111 = vmatprep.subr.bf16.mxu0 %v105
    %112 = vmatpush1.bf16.msra.mxu0 %v102
    %113 = vmatprep.subr.bf16.mxu0 0
    %114 = vmatpush1.bf16.msra.mxu0 0
    %115 = vmatprep.subr.bf16.mxu0 0
    %116 = vmatpush1.bf16.msra.mxu0 0
    %117 = vmatprep.subr.bf16.mxu0 0
    %118 = vmatpush1.bf16.msra.mxu0 0
    %119 = vmatprep.subr.bf16.mxu0 0
    %120 = vmatpush1.bf16.msra.mxu0 0
    %121 = vmatprep.subr.bf16.mxu0 0
    %122 = vmatpush1.bf16.msra.mxu0 0
    %123 = vmatprep.subr.bf16.mxu0 0
    %124 = vmatpush1.bf16.msra.mxu0 0
    %125 = vmatprep.subr.bf16.mxu0 0
    %126 = vmatpush1.bf16.msra.mxu0 0
    %127 = vmatprep.subr.bf16.mxu0 0
    %128 = vmatpush1.bf16.msra.mxu0 0
    %129 = vmatprep.subr.bf16.mxu0 0
    %130 = vmatpush1.bf16.msra.mxu0 0
    %131 = vmatprep.subr.bf16.mxu0 0
    %132 = vmatpush1.bf16.msra.mxu0 0
    %133 = vmatprep.subr.bf16.mxu0 0
    %134 = vmatpush1.bf16.msra.mxu0 0
    %135 = vmatprep.subr.bf16.mxu0 0
    %136 = vmatpush1.bf16.msra.mxu0 0
    %137 = vmatprep.subr.bf16.mxu0 0
    %138 = vmatpush1.bf16.msra.mxu0 0
    %139 = vmatprep.mubr.bf16.mxu0 0
    %140 = vmatmul.mubr.bf16.gmra.mrb[0].mxu0 %v96
    %v141 = vpop.f32.mrb[0].mxu0
    %v142 = vadd.f32 0.0, %v141
    %v143 = vpop.f32.mrb[0].mxu0
    %v144 = vadd.f32 0.0, %v143
    %v145 = vpop.f32.mrb[0].mxu0
    %v146 = vadd.f32 0.0, %v145
    %v147 = vpop.f32.mrb[0].mxu0
    %v148 = vadd.f32 0.0, %v147
    %149 = vdwg.mxu0
    %v150 = vlaneseq
    %v151 = vand.u32 %v150, 127
    %v152 = vadd.s32 %v151, 128
    %v153 = vmin.f32 %v142, %v144
    %154 = vmin.xlane.f32.xlu0 %v153
    %v155 = vpop.xlane.xlu0 %154
    %v156 = vmin.f32 %v146, %v148
    %157 = vmin.xlane.f32.xlu0 %v156
    %v158 = vpop.xlane.xlu0 %157
    %vm159 = vcmp.eq.f32.partialorder %v142, %v155
    %vm160 = vcmp.eq.f32.partialorder %v144, %v155
    %vm161 = vcmp.eq.f32.partialorder %v146, %v158
    %vm162 = vcmp.eq.f32.partialorder %v148, %v158
    %v163 = vsel %vm159, %v151, 256
    %v164 = vsel %vm160, %v152, 256
    %v165 = vsel %vm161, %v151, 256
    %v166 = vsel %vm162, %v152, 256
    %vm167 = vcmp.lt.s32.totalorder %v163, %v164
    %v168 = vsel %vm167, %v163, %v164
    %v169 = vand.u32 %v168, 65535
    %v170 = vshra.s32 %v168, 16
    %v171 = vcvt.s32.f32 %v169
    %v172 = vcvt.s32.f32 %v170
    %173 = vmin.xlane.f32.xlu0 %v172
    %v174 = vpop.xlane.xlu0 %173
    %vm175 = vcmp.eq.f32.partialorder %v172, %v174
    %v176 = vsel %vm175, %v171, inf
    %177 = vmin.xlane.f32.xlu0 %v176
    %v178 = vpop.xlane.xlu0 %177
    %v179 = vcvt.f32.s32 %v178
    %v180 = vcvt.f32.s32 %v174
    %v181 = vshll.u32 %v180, 16
    %v182 = vadd.s32 %v181, %v179
    %vm183 = vcmp.lt.s32.totalorder %v165, %v166
    %v184 = vsel %vm183, %v165, %v166
    %v185 = vand.u32 %v184, 65535
    %v186 = vshra.s32 %v184, 16
    %v187 = vcvt.s32.f32 %v185
    %v188 = vcvt.s32.f32 %v186
    %189 = vmin.xlane.f32.xlu0 %v188
    %v190 = vpop.xlane.xlu0 %189
    %vm191 = vcmp.eq.f32.partialorder %v188, %v190
    %v192 = vsel %vm191, %v187, inf
    %193 = vmin.xlane.f32.xlu0 %v192
    %v194 = vpop.xlane.xlu0 %193
    %v195 = vcvt.f32.s32 %v194
    %v196 = vcvt.f32.s32 %v190
    %v197 = vshll.u32 %v196, 16
    %v198 = vadd.s32 %v197, %v195
    %vm199 = vcmp.eq.s32.totalorder %v151, %v182
    %vm200 = vcmp.eq.s32.totalorder %v152, %v182
    %vm201 = vcmp.eq.s32.totalorder %v151, %v198
    %vm202 = vcmp.eq.s32.totalorder %v152, %v198
    %v203 = vsel %vm199, 1, 0
    %v204 = vsel %vm200, 1, 0
    %v205 = vsel %vm201, 1, 0
    %v206 = vsel %vm202, 1, 0
    %v207 = vcvt.s32.f32 %v203
    %v208 = vcvt.s32.f32 %v204
    %v209 = vcvt.s32.f32 %v205
    %v210 = vcvt.s32.f32 %v206
    %v211 = vld [vmem:[#allocation7] sm:$0xff]
    %v212 = vld [vmem:[#allocation7 + $0x8] sm:$0xff]
    %v213 = vld [vmem:[#allocation7 + $0x10] sm:$0xff]
    %v214 = vld [vmem:[#allocation7 + $0x18] sm:$0xff]
    %v215 = vld [vmem:[#allocation7 + $0x20] sm:$0xff]
    %v216 = vld [vmem:[#allocation7 + $0x28] sm:$0xff]
    %v217 = vld [vmem:[#allocation7 + $0x30] sm:$0xff]
    %v218 = vld [vmem:[#allocation7 + $0x38] sm:$0xff]
    %v219 = vld [vmem:[#allocation7 + $0x40] sm:$0xff]
    %v220 = vld [vmem:[#allocation7 + $0x48] sm:$0xff]
    %v221 = vld [vmem:[#allocation7 + $0x50] sm:$0xff]
    %v222 = vld [vmem:[#allocation7 + $0x58] sm:$0xff]
    %v223 = vld [vmem:[#allocation7 + $0x60] sm:$0xff]
    %v224 = vld [vmem:[#allocation7 + $0x68] sm:$0xff]
    %v225 = vld [vmem:[#allocation7 + $0x70] sm:$0xff]
    %v226 = vld [vmem:[#allocation7 + $0x78] sm:$0xff]
    %v227 = vld [vmem:[#allocation7 + $0x80] sm:$0xff]
    %v228 = vld [vmem:[#allocation7 + $0x88] sm:$0xff]
    %v229 = vld [vmem:[#allocation7 + $0x90] sm:$0xff]
    %v230 = vld [vmem:[#allocation7 + $0x98] sm:$0xff]
    %v231 = vld [vmem:[#allocation7 + $0xa0] sm:$0xff]
    %v232 = vld [vmem:[#allocation7 + $0xa8] sm:$0xff]
    %v233 = vld [vmem:[#allocation7 + $0xb0] sm:$0xff]
    %v234 = vld [vmem:[#allocation7 + $0xb8] sm:$0xff]
    %v235 = vld [vmem:[#allocation7 + $0xc0] sm:$0xff]
    %v236 = vld [vmem:[#allocation7 + $0xc8] sm:$0xff]
    %v237 = vld [vmem:[#allocation7 + $0xd0] sm:$0xff]
    %v238 = vld [vmem:[#allocation7 + $0xd8] sm:$0xff]
    %v239 = vld [vmem:[#allocation7 + $0xe0] sm:$0xff]
    %v240 = vld [vmem:[#allocation7 + $0xe8] sm:$0xff]
    %v241 = vld [vmem:[#allocation7 + $0xf0] sm:$0xff]
    %v242 = vld [vmem:[#allocation7 + $0xf8] sm:$0xff]
    %243 = vmatprep.subr.mxu0 0.0
    %244 = vmatpush1.msra.mxu0 %v211
    %245 = vmatprep.subr.mxu0 0.0
    %246 = vmatpush1.msra.mxu0 %v212
    %247 = vmatprep.subr.mxu0 0.0
    %248 = vmatpush1.msra.mxu0 %v213
    %249 = vmatprep.subr.mxu0 0.0
    %250 = vmatpush1.msra.mxu0 %v214
    %251 = vmatprep.subr.mxu0 0.0
    %252 = vmatpush1.msra.mxu0 %v215
    %253 = vmatprep.subr.mxu0 0.0
    %254 = vmatpush1.msra.mxu0 %v216
    %255 = vmatprep.subr.mxu0 0.0
    %256 = vmatpush1.msra.mxu0 %v217
    %257 = vmatprep.subr.mxu0 0.0
    %258 = vmatpush1.msra.mxu0 %v218
    %259 = vmatprep.subr.mxu0 0.0
    %260 = vmatpush1.msra.mxu0 %v219
    %261 = vmatprep.subr.mxu0 0.0
    %262 = vmatpush1.msra.mxu0 %v220
    %263 = vmatprep.subr.mxu0 0.0
    %264 = vmatpush1.msra.mxu0 %v221
    %265 = vmatprep.subr.mxu0 0.0
    %266 = vmatpush1.msra.mxu0 %v222
    %267 = vmatprep.subr.mxu0 0.0
    %268 = vmatpush1.msra.mxu0 %v223
    %269 = vmatprep.subr.mxu0 0.0
    %270 = vmatpush1.msra.mxu0 %v224
    %271 = vmatprep.subr.mxu0 0.0
    %272 = vmatpush1.msra.mxu0 %v225
    %273 = vmatprep.subr.mxu0 0.0
    %274 = vmatpush1.msra.mxu0 %v226
    %275 = vmatprep.subr.mxu0 0.0
    %276 = vmatpush1.msra.mxu0 %v227
    %277 = vmatprep.subr.mxu0 0.0
    %278 = vmatpush1.msra.mxu0 %v228
    %279 = vmatprep.subr.mxu0 0.0
    %280 = vmatpush1.msra.mxu0 %v229
    %281 = vmatprep.subr.mxu0 0.0
    %282 = vmatpush1.msra.mxu0 %v230
    %283 = vmatprep.subr.mxu0 0.0
    %284 = vmatpush1.msra.mxu0 %v231
    %285 = vmatprep.subr.mxu0 0.0
    %286 = vmatpush1.msra.mxu0 %v232
    %287 = vmatprep.subr.mxu0 0.0
    %288 = vmatpush1.msra.mxu0 %v233
    %289 = vmatprep.subr.mxu0 0.0
    %290 = vmatpush1.msra.mxu0 %v234
    %291 = vmatprep.subr.mxu0 0.0
    %292 = vmatpush1.msra.mxu0 %v235
    %293 = vmatprep.subr.mxu0 0.0
    %294 = vmatpush1.msra.mxu0 %v236
    %295 = vmatprep.subr.mxu0 0.0
    %296 = vmatpush1.msra.mxu0 %v237
    %297 = vmatprep.subr.mxu0 0.0
    %298 = vmatpush1.msra.mxu0 %v238
    %299 = vmatprep.subr.mxu0 0.0
    %300 = vmatpush1.msra.mxu0 %v239
    %301 = vmatprep.subr.mxu0 0.0
    %302 = vmatpush1.msra.mxu0 %v240
    %303 = vmatprep.subr.mxu0 0.0
    %304 = vmatpush1.msra.mxu0 %v241
    %305 = vmatprep.subr.mxu0 0.0
    %306 = vmatpush1.msra.mxu0 %v242
    %307 = vmatprep.mubr.f32.mxu0 %v208
    %308 = vmatmul.mubr.f32.gmra.mrb[0].mxu0 %v207
    %v309 = vpop.f32.mrb[0].mxu0
    %v310 = vadd.f32 0.0, %v309
    %v311 = vpop.f32.mrb[0].mxu0
    %312 = vmatprep.mubr.f32.mxu0 %v210
    %313 = vmatmul.mubr.f32.gmra.mrb[0].mxu0 %v209
    %v314 = vpop.f32.mrb[0].mxu0
    %v315 = vadd.f32 0.0, %v314
    %v316 = vpop.f32.mrb[0].mxu0
    %317 = vdwg.mxu0
    %vm318 = vcmask 261120
    %319 = vst.msk [vmem:[#allocation8] sm:$0xff] %vm318, %v310
    %320 = vst.msk [vmem:[#allocation8 + $0x8] sm:$0xff] %vm318, %v315
    %v321 = vsub.f32 %v61, %v310
    %v322 = vsub.f32 %v62, %v315
    %v323 = vmul.f32 %v321, %v321
    %v324 = vmul.f32 %v322, %v322
    %v325 = vsel %vm318, %v323, 0.0
    %326 = vadd.xlane.f32.xlu0 %v325
    %v327 = vpop.xlane.xlu0 %326
    %v328 = vsel %vm318, %v324, 0.0
    %329 = vadd.xlane.f32.xlu0 %v328
    %v330 = vpop.xlane.xlu0 %329
    %v331 = vadd.f32 %v327, %v330
    %v332 = vrot.slane %v331, 4
    %v333 = vadd.f32 %v331, %v332
    %v334 = vrot.slane %v333, 2
    %v335 = vadd.f32 %v333, %v334
    %v336 = vrot.slane %v335, 1
    %v337 = vadd.f32 %v335, %v336
    %vm338 = vcmask 0
    %339 = vst.msk [vmem:[#allocation9] sm:$0x1] %vm338, %v337
    %v340 = vadd.f32 %v207, %v209
    %v341 = vrot.slane %v340, 4
    %v342 = vadd.f32 %v340, %v341
    %v343 = vrot.slane %v342, 2
    %v344 = vadd.f32 %v342, %v343
    %v345 = vrot.slane %v344, 1
    %v346 = vadd.f32 %v344, %v345
    %v347 = vadd.f32 %v208, %v210
    %v348 = vrot.slane %v347, 4
    %v349 = vadd.f32 %v347, %v348
    %v350 = vrot.slane %v349, 2
    %v351 = vadd.f32 %v349, %v350
    %v352 = vrot.slane %v351, 1
    %v353 = vadd.f32 %v351, %v352
    %v356 = vcombine.low %v346, %v353
    %v358 = vunpack.c.l.s4 1966171168
    %v359 = vunpack.c.0.s8 %v358
    %v360 = vlaneseq
    %v361 = vshrl.u32 %v360, 7
    %v362 = vsub.s32 %v359, %v361
    %v363 = vrot.slane %v356, %v362
    %v365 = vunpack.c.l.s4 1966171168
    %v366 = vunpack.c.0.s8 %v365
    %v367 = vlaneseq
    %v368 = vshrl.u32 %v367, 7
    %v369 = vsub.s32 %v366, %v368
    %v370 = vrot.slane %v363, %v369
    %v372 = vlaneseq
    %vm373 = vcmp.ge.s32.totalorder %v372, 0
    %vm374 = vcmp.lt.s32.totalorder %v372, 256
    %vm375 = vmand %vm373, %vm374
    %376 = vst.msk [vmem:[#allocation11] sm:$0x3] %vm375, %v370
    // Predicated region
    $region26: #{vq_embedding_ema_forward.1} parent=1 // pred_check
      _
    $region27: #{vq_embedding_ema_forward.1} parent=1 // pred_check_branch
      %378 = sbr.rel (0) target = $region29
    $region28: #{vq_embedding_ema_forward.1} parent=1 // pred_region
      %s380 = ssub.s32 256, 256
      %381 = vsyncadd [#allocation4], %s380
      %s382 = sshll.u32 [#allocation8], 4
      %s383 = int_to_ptr.vmem [resolvable:$true] %s382
      %388 = dma.vmem_to_hbm [thread:$0]  %s383, 256, %s3, [#allocation4], 128, 128, 8
    $region29: #{vq_embedding_ema_forward.1} parent=1 // pred_fallthru
      _
    // Predicated region
    $region30: #{vq_embedding_ema_forward.1} parent=1 // pred_check
      _
    $region31: #{vq_embedding_ema_forward.1} parent=1 // pred_check_branch
      %390 = sbr.rel (0) target = $region33
    $region32: #{vq_embedding_ema_forward.1} parent=1 // pred_region
      %s392 = ssub.s32 16, 16
      %393 = vsyncadd [#allocation10], %s392
      %s395 = sshll.u32 [#allocation9], 4
      %s396 = int_to_ptr.vmem [resolvable:$true] %s395
      %398 = dma.vmem_to_hbm [thread:$0]  %s396, 16, %s4, [#allocation10]
    $region33: #{vq_embedding_ema_forward.1} parent=1 // pred_fallthru
      _
    // Predicated region
    $region34: #{vq_embedding_ema_forward.1} parent=1 // pred_check
      _
    $region35: #{vq_embedding_ema_forward.1} parent=1 // pred_check_branch
      %400 = sbr.rel (0) target = $region37
    $region36: #{vq_embedding_ema_forward.1} parent=1 // pred_region
      %s402 = ssub.s32 32, 32
      %403 = vsyncadd [#allocation10], %s402
      %s405 = sshll.u32 [#allocation11], 4
      %s406 = int_to_ptr.vmem [resolvable:$true] %s405
      %408 = dma.vmem_to_hbm [thread:$0]  %s406, 32, %s5, [#allocation10]
    $region37: #{vq_embedding_ema_forward.1} parent=1 // pred_fallthru
      _
    // Predicated region
    $region38: #{vq_embedding_ema_forward.1} parent=1 // pred_check
      _
    $region39: #{vq_embedding_ema_forward.1} parent=1 // pred_check_branch
      %410 = sbr.rel (0) target = $region41
    $region40: #{vq_embedding_ema_forward.1} parent=1 // pred_region
      %411 = dma.done [#allocation4], 256
    $region41: #{vq_embedding_ema_forward.1} parent=1 // pred_fallthru
      _
    // Predicated region
    $region42: #{vq_embedding_ema_forward.1} parent=1 // pred_check
      _
    $region43: #{vq_embedding_ema_forward.1} parent=1 // pred_check_branch
      %413 = sbr.rel (0) target = $region45
    $region44: #{vq_embedding_ema_forward.1} parent=1 // pred_region
      %414 = dma.done [#allocation10], 16
    $region45: #{vq_embedding_ema_forward.1} parent=1 // pred_fallthru
      _
    // Predicated region
    $region46: #{vq_embedding_ema_forward.1} parent=1 // pred_check
      _
    $region47: #{vq_embedding_ema_forward.1} parent=1 // pred_check_branch
      %416 = sbr.rel (0) target = $region49
    $region48: #{vq_embedding_ema_forward.1} parent=1 // pred_region
      %417 = dma.done [#allocation10], 32
    $region49: #{vq_embedding_ema_forward.1} parent=1 // pred_fallthru
      _
    %418 = vsyncpa [#allocation3], 1
    %419 = vsyncpa [#allocation6], 1
    %420 = vsyncpa [#allocation4], 1
    %421 = vsyncpa [#allocation10], 1

</llo_original>
